<compile_context>
chip_gen: v7x
topology: tpu7x:2x2x1
jax: 0.10.0
libtpu: 0.0.40
codegen_flags: <defaults>
</compile_context>

<pallas_src>
import functools

import jax
import jax.numpy as jnp
from jax.experimental import pallas as pl
from jax.experimental.pallas import tpu as pltpu


def _decoder_lstm_kernel(n_layers, hid_dim, state_ref, w_ref, out_ref):
    """state_ref: (n_layers+1, Bp, 4H) f32   packed [x|h0|c0|0|1] rows (fc2 row at the end)
       w_ref:     (n_layers+1, 4H, 4H) bf16  packed [w_in ; w_hh ; 0 ; bias] rows
       out_ref:   (n_layers+1, Bp, 4H) f32   per layer: lanes [0,H)=h_new, [H,2H)=c_new;
                                             last index: prediction in lanes [0, I)."""
    H = hid_dim
    G = 4 * H
    Bp = state_ref.shape[1]
    f32 = jnp.float32

    # Lane-block masks, hoisted out of the layer loop (all full (Bp, G) tiles).
    lane = jax.lax.broadcasted_iota(jnp.int32, (Bp, G), 1)
    mask_b0 = lane < H                              # block 0: i-gate / h lanes
    mask_b1 = (lane >= H) & (lane < 2 * H)          # block 1: f-gate
    mask_b2 = (lane >= 2 * H) & (lane < 3 * H)      # block 2: g-gate / c0 lanes
    mask_b3 = lane >= 3 * H                         # block 3: o-gate
    mask_02 = mask_b0 | mask_b2

    h_rep = None
    for l in range(n_layers):                       # static unroll over LSTM layers
        right = state_ref[l]                        # [x_or_0 | h0_l | c0_l | 0 | 1]
        if l == 0:
            lhs = right                             # layer-0 LHS fully prepacked
        else:
            # Previous layer's h (replicated in every block) drops into lanes [0, H).
            lhs = jnp.where(mask_b0, h_rep, right)

        # One fused MXU dot: input proj + hidden proj + all biases (constant-1 lane).
        pre = jnp.dot(lhs, w_ref[l].astype(f32), preferred_element_type=f32)

        # Full-tile nonlinearities in f32 (VPU/EUP); gate order is PyTorch [i f g o].
        act = jnp.where(mask_b2, jnp.tanh(pre), jax.nn.sigmoid(pre))

        # i*g replicated into every block.  roll-by-2H on a 4H tile and roll-by-H on
        # 2H-periodic data are both independent of the hardware rotate direction.
        r2 = pltpu.roll(act, shift=2 * H, axis=1)          # [g o i f]
        p = act * r2                                        # [ig fo ig fo]  (2H-periodic)
        p_sw = pltpu.roll(p, shift=H, axis=1)               # [fo ig fo ig]
        ig_rep = jnp.where(mask_02, p, p_sw)                # i*g in every block

        # f, o and c_prev each replicated into every block (2 rolls + mask apiece).
        f1 = jnp.where(mask_b1, act, 0.0)
        f2 = f1 + pltpu.roll(f1, shift=2 * H, axis=1)        # [0 f 0 f]  (2H-periodic)
        f_rep = f2 + pltpu.roll(f2, shift=H, axis=1)

        o1 = jnp.where(mask_b3, act, 0.0)
        o2 = o1 + pltpu.roll(o1, shift=2 * H, axis=1)        # [0 o 0 o]
        o_rep = o2 + pltpu.roll(o2, shift=H, axis=1)

        c1 = jnp.where(mask_b2, right, 0.0)                  # c0_l rides in block 2
        c2 = c1 + pltpu.roll(c1, shift=2 * H, axis=1)        # [c 0 c 0]
        c_prev = c2 + pltpu.roll(c2, shift=H, axis=1)

        c_new = f_rep * c_prev + ig_rep                      # replicated in every block
        h_rep = o_rep * jnp.tanh(c_new)                      # replicated in every block

        # Lane-dense packed output tile: lanes [0,H)=h_new, [H,2H)=c_new (rest = c_new).
        out_ref[l] = jnp.where(mask_b0, h_rep, c_new)
        # inter-layer dropout of nn.LSTM is identity in eval mode.

    # fc2 as one more fused-dot "layer": weight rows [0,H) = fc2_w, row G-1 = fc2_b,
    # LHS = [h_final | 0 | 0 | 0 | 1].
    lhs = jnp.where(mask_b0, h_rep, state_ref[n_layers])
    out_ref[n_layers] = jnp.dot(lhs, w_ref[n_layers].astype(f32),
                                preferred_element_type=f32)


def pack_params(params, *, input_dim, hid_dim, n_layers):
    """One-time repack of PyTorch-layout parameters into ONE bf16 weight blob.

    Per layer l, blob[l] is (4H, 4H) with rows:
      [0, H)      : input projection (layer 0: fc1 folded in, rows [0, I) used)
      [H, 2H)     : hidden projection w_hh_l
      [2H, 4H-1)  : zero (LHS carries c0 / padding in these lanes)
      4H-1        : b_ih_l + b_hh_l (+ fc1 bias fold for layer 0)
    blob[n_layers] holds fc2 (rows [0, H) = fc2_w, row 4H-1 = fc2_b)."""
    H, I = hid_dim, input_dim
    G = 4 * H
    assert G == 128, "kernel lane layout is specialized to 4*hid_dim == 128"
    assert I <= H, "layer-0 input lanes must fit in the first H lanes"
    f32 = jnp.float32

    # Fold fc1 (and its bias) into the layer-0 input projection (dropout is identity in eval).
    w_in0 = params["fc1_w"] @ params["w_ih0"]               # (I, 4H)
    b0_fc1 = params["fc1_b"] @ params["w_ih0"]              # (1, 4H)

    blobs = []
    for l in range(n_layers):
        bias = params["b_ih"][l] + params["b_hh"][l]        # (1, 4H), pre-summed
        if l == 0:
            rows_in = w_in0
            bias = bias + b0_fc1
        else:
            rows_in = params["w_ih_rest"][l - 1]            # (H, 4H)
        w = (jnp.zeros((G, G), f32)
             .at[:rows_in.shape[0], :].set(rows_in)         # input-projection rows
             .at[H:2 * H, :].set(params["w_hh"][l])         # hidden-projection rows
             .at[G - 1, :].set(bias[0]))                    # bias rides on constant-1 lane
        blobs.append(w)

    w_fc2 = (jnp.zeros((G, G), f32)
             .at[:H, :I].set(params["fc2_w"])
             .at[G - 1, :I].set(params["fc2_b"][0]))
    blobs.append(w_fc2)

    return {"w_pack": jnp.stack(blobs).astype(jnp.bfloat16)}   # (n_layers+1, 4H, 4H)


@functools.partial(jax.jit, static_argnames=("n_layers", "hid_dim"))
def decoder_lstm_pallas(x, h0, c0, packed, *, n_layers, hid_dim):
    H = hid_dim
    G = 4 * H
    B, I = x.shape
    Bp = max(8, ((B + 7) // 8) * 8)                          # sublane-padded batch
    f32 = jnp.float32
    assert G == 128 and I <= H

    # Layout plumbing only (one packed state blob): x / h0 / c0 / constant-1 bias lane.
    # Lanes per 128-wide row-group: [0,H)=x (layer 0 only), [H,2H)=h0_l, [2H,3H)=c0_l,
    # [3H, 4H-1)=0, 4H-1=1.  Index n_layers is the (mostly zero) fc2 row-group.
    state = (jnp.zeros((n_layers + 1, Bp, G), f32)
             .at[0, :B, :I].set(x)
             .at[:n_layers, :B, H:2 * H].set(h0)
             .at[:n_layers, :B, 2 * H:3 * H].set(c0)
             .at[:, :, G - 1].set(1.0))

    kernel = functools.partial(_decoder_lstm_kernel, n_layers, hid_dim)
    vmem = pl.BlockSpec(memory_space=pltpu.MemorySpace.VMEM)
    out = pl.pallas_call(
        kernel,
        out_shape=jax.ShapeDtypeStruct((n_layers + 1, Bp, G), f32),
        in_specs=[vmem, vmem],
        out_specs=vmem,
    )(state, packed["w_pack"])

    pred = out[n_layers, :B, :I]
    h_new = out[:n_layers, :B, :H]
    c_new = out[:n_layers, :B, H:2 * H]
    return pred, h_new, c_new


def decoder_lstm_ref(x, h0, c0, params, *, n_layers, hid_dim):
    """Pure-JAX reference with the original (unfolded, f32) module semantics."""
    H = hid_dim
    x = x @ params["fc1_w"] + params["fc1_b"]
    h_out, c_out = [], []
    layer_in = x
    for l in range(n_layers):
        w_ih = params["w_ih0"] if l == 0 else params["w_ih_rest"][l - 1]
        gates = (layer_in @ w_ih + h0[l] @ params["w_hh"][l]
                 + params["b_ih"][l] + params["b_hh"][l])
        i_g = jax.nn.sigmoid(gates[:, 0 * H:1 * H])
        f_g = jax.nn.sigmoid(gates[:, 1 * H:2 * H])
        g_g = jnp.tanh(gates[:, 2 * H:3 * H])
        o_g = jax.nn.sigmoid(gates[:, 3 * H:4 * H])
        c_new = f_g * c0[l] + i_g * g_g
        h_new = o_g * jnp.tanh(c_new)
        h_out.append(h_new)
        c_out.append(c_new)
        layer_in = h_new
    pred = layer_in @ params["fc2_w"] + params["fc2_b"]
    return pred, jnp.stack(h_out), jnp.stack(c_out)


def make_params(key, input_dim, hid_dim, n_layers):
    ks = jax.random.split(key, 12)
    scale = 0.1
    n_rest = n_layers - 1
    return {
        # Linear weights stored as (in, out) == PyTorch weight.T
        "fc1_w": scale * jax.random.normal(ks[0], (input_dim, input_dim), jnp.float32),
        "fc1_b": scale * jax.random.normal(ks[1], (1, input_dim), jnp.float32),
        "fc2_w": scale * jax.random.normal(ks[2], (hid_dim, input_dim), jnp.float32),
        "fc2_b": scale * jax.random.normal(ks[3], (1, input_dim), jnp.float32),
        # LSTM weights, (in, 4H) layout == PyTorch weight_ih_l{k}.T / weight_hh_l{k}.T
        "w_ih0": scale * jax.random.normal(ks[4], (input_dim, 4 * hid_dim), jnp.float32),
        "w_ih_rest": scale * jax.random.normal(ks[5], (n_rest, hid_dim, 4 * hid_dim), jnp.float32),
        "w_hh": scale * jax.random.normal(ks[6], (n_layers, hid_dim, 4 * hid_dim), jnp.float32),
        "b_ih": scale * jax.random.normal(ks[7], (n_layers, 1, 4 * hid_dim), jnp.float32),
        "b_hh": scale * jax.random.normal(ks[8], (n_layers, 1, 4 * hid_dim), jnp.float32),
    }


if __name__ == "__main__":
    B = 4            # batch
    input_dim = 16   # input (and prediction) feature dim
    hid_dim = 32     # LSTM hidden dim
    n_layers = 2

    key = jax.random.PRNGKey(0)
    k_x, k_h, k_c, k_p = jax.random.split(key, 4)
    x = jax.random.normal(k_x, (B, input_dim), jnp.float32)
    h0 = jax.random.normal(k_h, (n_layers, B, hid_dim), jnp.float32)
    c0 = jax.random.normal(k_c, (n_layers, B, hid_dim), jnp.float32)
    params = make_params(k_p, input_dim, hid_dim, n_layers)
    packed = pack_params(params, input_dim=input_dim, hid_dim=hid_dim, n_layers=n_layers)

    pred, h_new, c_new = decoder_lstm_pallas(
        x, h0, c0, packed, n_layers=n_layers, hid_dim=hid_dim)
    jax.block_until_ready((pred, h_new, c_new))

    pred_r, h_r, c_r = decoder_lstm_ref(
        x, h0, c0, params, n_layers=n_layers, hid_dim=hid_dim)

    assert pred.shape == (B, input_dim)
    assert h_new.shape == (n_layers, B, hid_dim)
    assert c_new.shape == (n_layers, B, hid_dim)
    # Tolerance covers (a) bf16 storage of the weights (intentional DMA optimization) and
    # (b) the folded-parameter / MXU-decomposed matmul rounding vs the unfolded f32
    # reference.  Structural bugs would be orders of magnitude larger.
    assert jnp.allclose(pred, pred_r, atol=1e-2, rtol=1e-2), \
        float(jnp.max(jnp.abs(pred - pred_r)))
    assert jnp.allclose(h_new, h_r, atol=1e-2, rtol=1e-2), \
        float(jnp.max(jnp.abs(h_new - h_r)))
    assert jnp.allclose(c_new, c_r, atol=1e-2, rtol=1e-2), \
        float(jnp.max(jnp.abs(c_new - c_r)))

    print("KERNEL_OK")
</pallas_src>

<mosaic_0001>
module attributes {stable_mosaic.version = 11 : i64} {
  func.func @_decoder_lstm_kernel(%arg0: memref<3x8x128xf32, #tpu.memory_space<vmem>>, %arg1: memref<3x128x128xbf16, #tpu.memory_space<vmem>>, %arg2: memref<3x8x128xf32, #tpu.memory_space<vmem>>) attributes {dimension_semantics = [], scalar_prefetch = 0 : i64, scratch_operands = 0 : i64, tpu.core_type = #tpu.core_type<tc>} {
    %0 = tpu.iota {dimensions = array<i32: 1>} : vector<8x128xi32>
    %c32_i32 = arith.constant 32 : i32
    %1 = vector.broadcast %c32_i32 : i32 to vector<8x128xi32>
    %2 = arith.cmpi slt, %0, %1 : vector<8x128xi32>
    %c32_i32_0 = arith.constant 32 : i32
    %3 = vector.broadcast %c32_i32_0 : i32 to vector<8x128xi32>
    %4 = arith.cmpi sge, %0, %3 : vector<8x128xi32>
    %c64_i32 = arith.constant 64 : i32
    %5 = vector.broadcast %c64_i32 : i32 to vector<8x128xi32>
    %6 = arith.cmpi slt, %0, %5 : vector<8x128xi32>
    %7 = arith.andi %4, %6 : vector<8x128xi1>
    %c64_i32_1 = arith.constant 64 : i32
    %8 = vector.broadcast %c64_i32_1 : i32 to vector<8x128xi32>
    %9 = arith.cmpi sge, %0, %8 : vector<8x128xi32>
    %c96_i32 = arith.constant 96 : i32
    %10 = vector.broadcast %c96_i32 : i32 to vector<8x128xi32>
    %11 = arith.cmpi slt, %0, %10 : vector<8x128xi32>
    %12 = arith.andi %9, %11 : vector<8x128xi1>
    %c96_i32_2 = arith.constant 96 : i32
    %13 = vector.broadcast %c96_i32_2 : i32 to vector<8x128xi32>
    %14 = arith.cmpi sge, %0, %13 : vector<8x128xi32>
    %15 = arith.ori %2, %12 : vector<8x128xi1>
    %c0 = arith.constant 0 : index
    %c0_3 = arith.constant 0 : index
    %c0_4 = arith.constant 0 : index
    %16 = vector.load %arg0[%c0, %c0_3, %c0_4] : memref<3x8x128xf32, #tpu.memory_space<vmem>>, vector<1x8x128xf32>
    %17 = vector.shape_cast %16 : vector<1x8x128xf32> to vector<8x128xf32>
    %c0_5 = arith.constant 0 : index
    %c0_6 = arith.constant 0 : index
    %c0_7 = arith.constant 0 : index
    %18 = vector.load %arg1[%c0_5, %c0_6, %c0_7] : memref<3x128x128xbf16, #tpu.memory_space<vmem>>, vector<1x128x128xbf16>
    %19 = vector.shape_cast %18 : vector<1x128x128xbf16> to vector<128x128xbf16>
    %20 = arith.extf %19 : vector<128x128xbf16> to vector<128x128xf32>
    %cst = arith.constant dense<0.000000e+00> : vector<8x128xf32>
    %21 = tpu.matmul %17, %20, %cst {dimension_numbers = #tpu.dot_dimension_numbers<[1], [0], [0], [1], [0, 0, 1, 1], [], []>} : vector<8x128xf32>, vector<128x128xf32>, vector<8x128xf32> -> vector<8x128xf32>
    %22 = math.tanh %21 : vector<8x128xf32>
    %23 = arith.negf %21 : vector<8x128xf32>
    %24 = math.exp %23 : vector<8x128xf32>
    %cst_8 = arith.constant 1.000000e+00 : f32
    %25 = vector.broadcast %cst_8 : f32 to vector<8x128xf32>
    %26 = arith.addf %25, %24 : vector<8x128xf32>
    %27 = arith.divf %25, %26 : vector<8x128xf32>
    %28 = arith.select %12, %22, %27 : vector<8x128xi1>, vector<8x128xf32>
    %c64_i32_9 = arith.constant 64 : i32
    %29 = tpu.dynamic_rotate %28 by %c64_i32_9 dim 1 : vector<8x128xf32>, i32 -> vector<8x128xf32>
    %30 = arith.mulf %28, %29 : vector<8x128xf32>
    %c32_i32_10 = arith.constant 32 : i32
    %31 = tpu.dynamic_rotate %30 by %c32_i32_10 dim 1 : vector<8x128xf32>, i32 -> vector<8x128xf32>
    %32 = arith.select %15, %30, %31 : vector<8x128xi1>, vector<8x128xf32>
    %cst_11 = arith.constant 0.000000e+00 : f32
    %33 = vector.broadcast %cst_11 : f32 to vector<8x128xf32>
    %34 = arith.select %7, %28, %33 : vector<8x128xi1>, vector<8x128xf32>
    %c64_i32_12 = arith.constant 64 : i32
    %35 = tpu.dynamic_rotate %34 by %c64_i32_12 dim 1 : vector<8x128xf32>, i32 -> vector<8x128xf32>
    %36 = arith.addf %34, %35 : vector<8x128xf32>
    %c32_i32_13 = arith.constant 32 : i32
    %37 = tpu.dynamic_rotate %36 by %c32_i32_13 dim 1 : vector<8x128xf32>, i32 -> vector<8x128xf32>
    %38 = arith.addf %36, %37 : vector<8x128xf32>
    %cst_14 = arith.constant 0.000000e+00 : f32
    %39 = vector.broadcast %cst_14 : f32 to vector<8x128xf32>
    %40 = arith.select %14, %28, %39 : vector<8x128xi1>, vector<8x128xf32>
    %c64_i32_15 = arith.constant 64 : i32
    %41 = tpu.dynamic_rotate %40 by %c64_i32_15 dim 1 : vector<8x128xf32>, i32 -> vector<8x128xf32>
    %42 = arith.addf %40, %41 : vector<8x128xf32>
    %c32_i32_16 = arith.constant 32 : i32
    %43 = tpu.dynamic_rotate %42 by %c32_i32_16 dim 1 : vector<8x128xf32>, i32 -> vector<8x128xf32>
    %44 = arith.addf %42, %43 : vector<8x128xf32>
    %cst_17 = arith.constant 0.000000e+00 : f32
    %45 = vector.broadcast %cst_17 : f32 to vector<8x128xf32>
    %46 = arith.select %12, %17, %45 : vector<8x128xi1>, vector<8x128xf32>
    %c64_i32_18 = arith.constant 64 : i32
    %47 = tpu.dynamic_rotate %46 by %c64_i32_18 dim 1 : vector<8x128xf32>, i32 -> vector<8x128xf32>
    %48 = arith.addf %46, %47 : vector<8x128xf32>
    %c32_i32_19 = arith.constant 32 : i32
    %49 = tpu.dynamic_rotate %48 by %c32_i32_19 dim 1 : vector<8x128xf32>, i32 -> vector<8x128xf32>
    %50 = arith.addf %48, %49 : vector<8x128xf32>
    %51 = arith.mulf %38, %50 : vector<8x128xf32>
    %52 = arith.addf %51, %32 : vector<8x128xf32>
    %53 = math.tanh %52 : vector<8x128xf32>
    %54 = arith.mulf %44, %53 : vector<8x128xf32>
    %55 = arith.select %2, %54, %52 : vector<8x128xi1>, vector<8x128xf32>
    %c0_20 = arith.constant 0 : index
    %c0_21 = arith.constant 0 : index
    %c0_22 = arith.constant 0 : index
    %56 = vector.load %arg2[%c0_20, %c0_21, %c0_22] : memref<3x8x128xf32, #tpu.memory_space<vmem>>, vector<1x8x128xf32>
    %57 = vector.shape_cast %56 : vector<1x8x128xf32> to vector<8x128xf32>
    %58 = vector.shape_cast %55 : vector<8x128xf32> to vector<1x8x128xf32>
    tpu.vector_store %arg2[%c0_20, %c0_21, %c0_22], %58 {strides = array<i32>} : memref<3x8x128xf32, #tpu.memory_space<vmem>>, vector<1x8x128xf32>,
    %c1 = arith.constant 1 : index
    %c0_23 = arith.constant 0 : index
    %c0_24 = arith.constant 0 : index
    %59 = vector.load %arg0[%c1, %c0_23, %c0_24] : memref<3x8x128xf32, #tpu.memory_space<vmem>>, vector<1x8x128xf32>
    %60 = vector.shape_cast %59 : vector<1x8x128xf32> to vector<8x128xf32>
    %61 = arith.select %2, %54, %60 : vector<8x128xi1>, vector<8x128xf32>
    %c1_25 = arith.constant 1 : index
    %c0_26 = arith.constant 0 : index
    %c0_27 = arith.constant 0 : index
    %62 = vector.load %arg1[%c1_25, %c0_26, %c0_27] : memref<3x128x128xbf16, #tpu.memory_space<vmem>>, vector<1x128x128xbf16>
    %63 = vector.shape_cast %62 : vector<1x128x128xbf16> to vector<128x128xbf16>
    %64 = arith.extf %63 : vector<128x128xbf16> to vector<128x128xf32>
    %cst_28 = arith.constant dense<0.000000e+00> : vector<8x128xf32>
    %65 = tpu.matmul %61, %64, %cst_28 {dimension_numbers = #tpu.dot_dimension_numbers<[1], [0], [0], [1], [0, 0, 1, 1], [], []>} : vector<8x128xf32>, vector<128x128xf32>, vector<8x128xf32> -> vector<8x128xf32>
    %66 = math.tanh %65 : vector<8x128xf32>
    %67 = arith.negf %65 : vector<8x128xf32>
    %68 = math.exp %67 : vector<8x128xf32>
    %cst_29 = arith.constant 1.000000e+00 : f32
    %69 = vector.broadcast %cst_29 : f32 to vector<8x128xf32>
    %70 = arith.addf %69, %68 : vector<8x128xf32>
    %71 = arith.divf %69, %70 : vector<8x128xf32>
    %72 = arith.select %12, %66, %71 : vector<8x128xi1>, vector<8x128xf32>
    %c64_i32_30 = arith.constant 64 : i32
    %73 = tpu.dynamic_rotate %72 by %c64_i32_30 dim 1 : vector<8x128xf32>, i32 -> vector<8x128xf32>
    %74 = arith.mulf %72, %73 : vector<8x128xf32>
    %c32_i32_31 = arith.constant 32 : i32
    %75 = tpu.dynamic_rotate %74 by %c32_i32_31 dim 1 : vector<8x128xf32>, i32 -> vector<8x128xf32>
    %76 = arith.select %15, %74, %75 : vector<8x128xi1>, vector<8x128xf32>
    %cst_32 = arith.constant 0.000000e+00 : f32
    %77 = vector.broadcast %cst_32 : f32 to vector<8x128xf32>
    %78 = arith.select %7, %72, %77 : vector<8x128xi1>, vector<8x128xf32>
    %c64_i32_33 = arith.constant 64 : i32
    %79 = tpu.dynamic_rotate %78 by %c64_i32_33 dim 1 : vector<8x128xf32>, i32 -> vector<8x128xf32>
    %80 = arith.addf %78, %79 : vector<8x128xf32>
    %c32_i32_34 = arith.constant 32 : i32
    %81 = tpu.dynamic_rotate %80 by %c32_i32_34 dim 1 : vector<8x128xf32>, i32 -> vector<8x128xf32>
    %82 = arith.addf %80, %81 : vector<8x128xf32>
    %cst_35 = arith.constant 0.000000e+00 : f32
    %83 = vector.broadcast %cst_35 : f32 to vector<8x128xf32>
    %84 = arith.select %14, %72, %83 : vector<8x128xi1>, vector<8x128xf32>
    %c64_i32_36 = arith.constant 64 : i32
    %85 = tpu.dynamic_rotate %84 by %c64_i32_36 dim 1 : vector<8x128xf32>, i32 -> vector<8x128xf32>
    %86 = arith.addf %84, %85 : vector<8x128xf32>
    %c32_i32_37 = arith.constant 32 : i32
    %87 = tpu.dynamic_rotate %86 by %c32_i32_37 dim 1 : vector<8x128xf32>, i32 -> vector<8x128xf32>
    %88 = arith.addf %86, %87 : vector<8x128xf32>
    %cst_38 = arith.constant 0.000000e+00 : f32
    %89 = vector.broadcast %cst_38 : f32 to vector<8x128xf32>
    %90 = arith.select %12, %60, %89 : vector<8x128xi1>, vector<8x128xf32>
    %c64_i32_39 = arith.constant 64 : i32
    %91 = tpu.dynamic_rotate %90 by %c64_i32_39 dim 1 : vector<8x128xf32>, i32 -> vector<8x128xf32>
    %92 = arith.addf %90, %91 : vector<8x128xf32>
    %c32_i32_40 = arith.constant 32 : i32
    %93 = tpu.dynamic_rotate %92 by %c32_i32_40 dim 1 : vector<8x128xf32>, i32 -> vector<8x128xf32>
    %94 = arith.addf %92, %93 : vector<8x128xf32>
    %95 = arith.mulf %82, %94 : vector<8x128xf32>
    %96 = arith.addf %95, %76 : vector<8x128xf32>
    %97 = math.tanh %96 : vector<8x128xf32>
    %98 = arith.mulf %88, %97 : vector<8x128xf32>
    %99 = arith.select %2, %98, %96 : vector<8x128xi1>, vector<8x128xf32>
    %c1_41 = arith.constant 1 : index
    %c0_42 = arith.constant 0 : index
    %c0_43 = arith.constant 0 : index
    %100 = vector.load %arg2[%c1_41, %c0_42, %c0_43] : memref<3x8x128xf32, #tpu.memory_space<vmem>>, vector<1x8x128xf32>
    %101 = vector.shape_cast %100 : vector<1x8x128xf32> to vector<8x128xf32>
    %102 = vector.shape_cast %99 : vector<8x128xf32> to vector<1x8x128xf32>
    tpu.vector_store %arg2[%c1_41, %c0_42, %c0_43], %102 {strides = array<i32>} : memref<3x8x128xf32, #tpu.memory_space<vmem>>, vector<1x8x128xf32>,
    %c2 = arith.constant 2 : index
    %c0_44 = arith.constant 0 : index
    %c0_45 = arith.constant 0 : index
    %103 = vector.load %arg0[%c2, %c0_44, %c0_45] : memref<3x8x128xf32, #tpu.memory_space<vmem>>, vector<1x8x128xf32>
    %104 = vector.shape_cast %103 : vector<1x8x128xf32> to vector<8x128xf32>
    %105 = arith.select %2, %98, %104 : vector<8x128xi1>, vector<8x128xf32>
    %c2_46 = arith.constant 2 : index
    %c0_47 = arith.constant 0 : index
    %c0_48 = arith.constant 0 : index
    %106 = vector.load %arg1[%c2_46, %c0_47, %c0_48] : memref<3x128x128xbf16, #tpu.memory_space<vmem>>, vector<1x128x128xbf16>
    %107 = vector.shape_cast %106 : vector<1x128x128xbf16> to vector<128x128xbf16>
    %108 = arith.extf %107 : vector<128x128xbf16> to vector<128x128xf32>
    %cst_49 = arith.constant dense<0.000000e+00> : vector<8x128xf32>
    %109 = tpu.matmul %105, %108, %cst_49 {dimension_numbers = #tpu.dot_dimension_numbers<[1], [0], [0], [1], [0, 0, 1, 1], [], []>} : vector<8x128xf32>, vector<128x128xf32>, vector<8x128xf32> -> vector<8x128xf32>
    %c2_50 = arith.constant 2 : index
    %c0_51 = arith.constant 0 : index
    %c0_52 = arith.constant 0 : index
    %110 = vector.load %arg2[%c2_50, %c0_51, %c0_52] : memref<3x8x128xf32, #tpu.memory_space<vmem>>, vector<1x8x128xf32>
    %111 = vector.shape_cast %110 : vector<1x8x128xf32> to vector<8x128xf32>
    %112 = vector.shape_cast %109 : vector<8x128xf32> to vector<1x8x128xf32>
    tpu.vector_store %arg2[%c2_50, %c0_51, %c0_52], %112 {strides = array<i32>} : memref<3x8x128xf32, #tpu.memory_space<vmem>>, vector<1x8x128xf32>,
    return
  }
}

</mosaic_0001>

<llo_original>
// kernel: decoder_lstm_pallas.1
$region0: #{decoder_lstm_pallas.1}
  #allocation0 [shape = 'u32[]', space=smem, size = 0x4, offset = 0x4, fixed_abs, tag = 'smem constant byte address 0x4 - core index']
  #allocation1 [shape = 'u32[144,128]{1,0:T(1,128)}', space=vmem, size = 0x12000, scoped, tag = 'internal scratch']
  %s0 = inlined_call_operand.vmem [shape: f32[3,8,128], index: 0, kind: input, shape index: {}]
  %s1 = inlined_call_operand.hbm [shape: bf16[3,128,128], index: 1, kind: input, shape index: {}]
  %s2 = inlined_call_operand.vmem [shape: f32[3,8,128], index: 2, kind: output, shape index: {}]
  %s3 = sld [smem:[#allocation0]]
  $region22: #{decoder_lstm_pallas.1} parent=0
    _
  %s5 = ssub.s32 1, %s3
  %s6 = scalar_select 0, %s5, %s3
  $region1: #{decoder_lstm_pallas.1} parent=0
    #allocation2 [shape = 'u8[98304]{0}', space=vmem, size = 0x18000, scoped, tag = 'input window, operand 1, single buffered']
    #allocation3 [shape = 's32[1]{0}', space=sflag, size = 0x4, scoped, tag = 'scoped memory for decoder_lstm_pallas.1']
    %7 = vsyncpa [#allocation3], 0
    // Predicated region
    $region2: #{decoder_lstm_pallas.1} parent=1 // pred_check
      _
    $region3: #{decoder_lstm_pallas.1} parent=1 // pred_check_branch
      %9 = sbr.rel (0) target = $region5
    $region4: #{decoder_lstm_pallas.1} parent=1 // pred_region
      _
    $region5: #{decoder_lstm_pallas.1} parent=1 // pred_fallthru
      _
    // Predicated region
    $region6: #{decoder_lstm_pallas.1} parent=1 // pred_check
      _
    $region7: #{decoder_lstm_pallas.1} parent=1 // pred_check_branch
      %11 = sbr.rel (0) target = $region9
    $region8: #{decoder_lstm_pallas.1} parent=1 // pred_region
      %s13 = ssub.s32 3072, 3072
      %14 = vsyncadd [#allocation3], %s13
      %s15 = sshll.u32 [#allocation2], 4
      %s16 = int_to_ptr.vmem [resolvable:$true] %s15
      %21 = dma.hbm_to_vmem [thread:$0]  %s1, 3072, %s16, [#allocation3], 64, 64, 4
    $region9: #{decoder_lstm_pallas.1} parent=1 // pred_fallthru
      _
    // Predicated region
    $region10: #{decoder_lstm_pallas.1} parent=1 // pred_check
      _
    $region11: #{decoder_lstm_pallas.1} parent=1 // pred_check_branch
      %23 = sbr.rel (0) target = $region13
    $region12: #{decoder_lstm_pallas.1} parent=1 // pred_region
      %24 = dma.done [#allocation3], 3072
    $region13: #{decoder_lstm_pallas.1} parent=1 // pred_fallthru
      _
    %v25 = vlaneseq
    %v26 = vand.u32 %v25, 127
    %vm27 = vcmp.lt.s32.totalorder %v26, 32
    %vm28 = vcmp.ge.s32.totalorder %v26, 32
    %vm29 = vcmp.lt.s32.totalorder %v26, 64
    %vm30 = vmand %vm28, %vm29
    %vm31 = vcmp.ge.s32.totalorder %v26, 64
    %vm32 = vcmp.lt.s32.totalorder %v26, 96
    %vm33 = vmand %vm31, %vm32
    %vm34 = vcmp.ge.s32.totalorder %v26, 96
    %vm35 = vmor %vm27, %vm33
    %v36 = vld [vmem:[%s0] sm:$0xff]
    %v37 = vld [vmem:[#allocation2] sm:$0xf]
    %v38 = vld [vmem:[#allocation2 + $0x4] sm:$0xf]
    %v39 = vld [vmem:[#allocation2 + $0x8] sm:$0xf]
    %v40 = vld [vmem:[#allocation2 + $0xc] sm:$0xf]
    %v41 = vld [vmem:[#allocation2 + $0x10] sm:$0xf]
    %v42 = vld [vmem:[#allocation2 + $0x14] sm:$0xf]
    %v43 = vld [vmem:[#allocation2 + $0x18] sm:$0xf]
    %v44 = vld [vmem:[#allocation2 + $0x1c] sm:$0xf]
    %v45 = vld [vmem:[#allocation2 + $0x20] sm:$0xf]
    %v46 = vld [vmem:[#allocation2 + $0x24] sm:$0xf]
    %v47 = vld [vmem:[#allocation2 + $0x28] sm:$0xf]
    %v48 = vld [vmem:[#allocation2 + $0x2c] sm:$0xf]
    %v49 = vld [vmem:[#allocation2 + $0x30] sm:$0xf]
    %v50 = vld [vmem:[#allocation2 + $0x34] sm:$0xf]
    %v51 = vld [vmem:[#allocation2 + $0x38] sm:$0xf]
    %v52 = vld [vmem:[#allocation2 + $0x3c] sm:$0xf]
    %v53 = vunpack.c.l.bf16 %v37
    %v54 = vunpack.c.l.bf16 %v38
    %v55 = vunpack.c.l.bf16 %v39
    %v56 = vunpack.c.l.bf16 %v40
    %v57 = vunpack.c.l.bf16 %v41
    %v58 = vunpack.c.l.bf16 %v42
    %v59 = vunpack.c.l.bf16 %v43
    %v60 = vunpack.c.l.bf16 %v44
    %v61 = vunpack.c.l.bf16 %v45
    %v62 = vunpack.c.l.bf16 %v46
    %v63 = vunpack.c.l.bf16 %v47
    %v64 = vunpack.c.l.bf16 %v48
    %v65 = vunpack.c.l.bf16 %v49
    %v66 = vunpack.c.l.bf16 %v50
    %v67 = vunpack.c.l.bf16 %v51
    %v68 = vunpack.c.l.bf16 %v52
    %69 = vmatprep.subr.mxu0 0.0
    %70 = vmatpush1.msra.mxu0 %v53
    %71 = vmatprep.subr.mxu0 0.0
    %72 = vmatpush1.msra.mxu0 %v54
    %73 = vmatprep.subr.mxu0 0.0
    %74 = vmatpush1.msra.mxu0 %v55
    %75 = vmatprep.subr.mxu0 0.0
    %76 = vmatpush1.msra.mxu0 %v56
    %77 = vmatprep.subr.mxu0 0.0
    %78 = vmatpush1.msra.mxu0 %v57
    %79 = vmatprep.subr.mxu0 0.0
    %80 = vmatpush1.msra.mxu0 %v58
    %81 = vmatprep.subr.mxu0 0.0
    %82 = vmatpush1.msra.mxu0 %v59
    %83 = vmatprep.subr.mxu0 0.0
    %84 = vmatpush1.msra.mxu0 %v60
    %85 = vmatprep.subr.mxu0 0.0
    %86 = vmatpush1.msra.mxu0 %v61
    %87 = vmatprep.subr.mxu0 0.0
    %88 = vmatpush1.msra.mxu0 %v62
    %89 = vmatprep.subr.mxu0 0.0
    %90 = vmatpush1.msra.mxu0 %v63
    %91 = vmatprep.subr.mxu0 0.0
    %92 = vmatpush1.msra.mxu0 %v64
    %93 = vmatprep.subr.mxu0 0.0
    %94 = vmatpush1.msra.mxu0 %v65
    %95 = vmatprep.subr.mxu0 0.0
    %96 = vmatpush1.msra.mxu0 %v66
    %97 = vmatprep.subr.mxu0 0.0
    %98 = vmatpush1.msra.mxu0 %v67
    %99 = vmatprep.subr.mxu0 0.0
    %100 = vmatpush1.msra.mxu0 %v68
    %101 = vmatprep.subr.mxu0 0.0
    %102 = vmatpush1.msra.mxu0 0.0
    %103 = vmatprep.subr.mxu0 0.0
    %104 = vmatpush1.msra.mxu0 0.0
    %105 = vmatprep.subr.mxu0 0.0
    %106 = vmatpush1.msra.mxu0 0.0
    %107 = vmatprep.subr.mxu0 0.0
    %108 = vmatpush1.msra.mxu0 0.0
    %109 = vmatprep.subr.mxu0 0.0
    %110 = vmatpush1.msra.mxu0 0.0
    %111 = vmatprep.subr.mxu0 0.0
    %112 = vmatpush1.msra.mxu0 0.0
    %113 = vmatprep.subr.mxu0 0.0
    %114 = vmatpush1.msra.mxu0 0.0
    %115 = vmatprep.subr.mxu0 0.0
    %116 = vmatpush1.msra.mxu0 0.0
    %117 = vmatprep.subr.mxu0 0.0
    %118 = vmatpush1.msra.mxu0 0.0
    %119 = vmatprep.subr.mxu0 0.0
    %120 = vmatpush1.msra.mxu0 0.0
    %121 = vmatprep.subr.mxu0 0.0
    %122 = vmatpush1.msra.mxu0 0.0
    %123 = vmatprep.subr.mxu0 0.0
    %124 = vmatpush1.msra.mxu0 0.0
    %125 = vmatprep.subr.mxu0 0.0
    %126 = vmatpush1.msra.mxu0 0.0
    %127 = vmatprep.subr.mxu0 0.0
    %128 = vmatpush1.msra.mxu0 0.0
    %129 = vmatprep.subr.mxu0 0.0
    %130 = vmatpush1.msra.mxu0 0.0
    %131 = vmatprep.subr.mxu0 0.0
    %132 = vmatpush1.msra.mxu0 0.0
    %133 = vmatprep.mubr.f32.mxu0 0.0
    %134 = vmatmul.mubr.f32.gmra.mrb[0].mxu0 %v36
    %v135 = vpop.f32.mrb[0].mxu0
    %v136 = vadd.f32 0.0, %v135
    %v137 = vpop.f32.mrb[0].mxu0
    %138 = vdwg.mxu0
    %v139 = vtanh.pop %v136
    %v140 = vxor.u32 %v136, 2147483648
    %v141 = vmul.f32 %v140, 1.442695
    %v142 = vpow.pop %v141
    %v143 = vadd.f32 %v142, 1.0
    %v144 = vrcp.pop %v143
    %v145 = vmul.f32 1.0, %v144
    %v146 = vsel %vm33, %v139, %v145
    %147 = vrot.lane.b32.xlu0 %v146, 64
    %v148 = vpop.permute.xlu0 %147
    %v149 = vmul.f32 %v146, %v148
    %150 = vrot.lane.b32.xlu0 %v149, 32
    %v151 = vpop.permute.xlu0 %150
    %v152 = vsel %vm35, %v149, %v151
    %v153 = vsel %vm30, %v146, 0.0
    %154 = vrot.lane.b32.xlu0 %v153, 64
    %v155 = vpop.permute.xlu0 %154
    %v156 = vadd.f32 %v153, %v155
    %157 = vrot.lane.b32.xlu0 %v156, 32
    %v158 = vpop.permute.xlu0 %157
    %v159 = vadd.f32 %v156, %v158
    %v160 = vsel %vm34, %v146, 0.0
    %161 = vrot.lane.b32.xlu0 %v160, 64
    %v162 = vpop.permute.xlu0 %161
    %v163 = vadd.f32 %v160, %v162
    %164 = vrot.lane.b32.xlu0 %v163, 32
    %v165 = vpop.permute.xlu0 %164
    %v166 = vadd.f32 %v163, %v165
    %v167 = vsel %vm33, %v36, 0.0
    %168 = vrot.lane.b32.xlu0 %v167, 64
    %v169 = vpop.permute.xlu0 %168
    %v170 = vadd.f32 %v167, %v169
    %171 = vrot.lane.b32.xlu0 %v170, 32
    %v172 = vpop.permute.xlu0 %171
    %v173 = vadd.f32 %v170, %v172
    %v174 = vmul.f32 %v159, %v173
    %v175 = vadd.f32 %v174, %v152
    %v176 = vtanh.pop %v175
    %v177 = vmul.f32 %v166, %v176
    %v178 = vsel %vm27, %v177, %v175
    %179 = vst [vmem:[%s2] sm:$0xff] %v178
    %s180 = scalar_lea.vmem %s0, 8
    %v181 = vld [vmem:[%s180] sm:$0xff]
    %v182 = vsel %vm27, %v177, %v181
    %s183 = scalar_lea.vmem [#allocation2], 64
    %v184 = vld [vmem:[%s183] sm:$0xf]
    %v185 = vld [vmem:[%s183 + $0x4] sm:$0xf]
    %v186 = vld [vmem:[%s183 + $0x8] sm:$0xf]
    %v187 = vld [vmem:[%s183 + $0xc] sm:$0xf]
    %v188 = vld [vmem:[%s183 + $0x10] sm:$0xf]
    %v189 = vld [vmem:[%s183 + $0x14] sm:$0xf]
    %v190 = vld [vmem:[%s183 + $0x18] sm:$0xf]
    %v191 = vld [vmem:[%s183 + $0x1c] sm:$0xf]
    %v192 = vld [vmem:[%s183 + $0x20] sm:$0xf]
    %v193 = vld [vmem:[%s183 + $0x24] sm:$0xf]
    %v194 = vld [vmem:[%s183 + $0x28] sm:$0xf]
    %v195 = vld [vmem:[%s183 + $0x2c] sm:$0xf]
    %v196 = vld [vmem:[%s183 + $0x30] sm:$0xf]
    %v197 = vld [vmem:[%s183 + $0x34] sm:$0xf]
    %v198 = vld [vmem:[%s183 + $0x38] sm:$0xf]
    %v199 = vld [vmem:[%s183 + $0x3c] sm:$0xf]
    %v200 = vunpack.c.l.bf16 %v184
    %v201 = vunpack.c.l.bf16 %v185
    %v202 = vunpack.c.l.bf16 %v186
    %v203 = vunpack.c.l.bf16 %v187
    %v204 = vunpack.c.l.bf16 %v188
    %v205 = vunpack.c.l.bf16 %v189
    %v206 = vunpack.c.l.bf16 %v190
    %v207 = vunpack.c.l.bf16 %v191
    %v208 = vunpack.c.l.bf16 %v192
    %v209 = vunpack.c.l.bf16 %v193
    %v210 = vunpack.c.l.bf16 %v194
    %v211 = vunpack.c.l.bf16 %v195
    %v212 = vunpack.c.l.bf16 %v196
    %v213 = vunpack.c.l.bf16 %v197
    %v214 = vunpack.c.l.bf16 %v198
    %v215 = vunpack.c.l.bf16 %v199
    %216 = vmatprep.subr.mxu0 0.0
    %217 = vmatpush1.msra.mxu0 %v200
    %218 = vmatprep.subr.mxu0 0.0
    %219 = vmatpush1.msra.mxu0 %v201
    %220 = vmatprep.subr.mxu0 0.0
    %221 = vmatpush1.msra.mxu0 %v202
    %222 = vmatprep.subr.mxu0 0.0
    %223 = vmatpush1.msra.mxu0 %v203
    %224 = vmatprep.subr.mxu0 0.0
    %225 = vmatpush1.msra.mxu0 %v204
    %226 = vmatprep.subr.mxu0 0.0
    %227 = vmatpush1.msra.mxu0 %v205
    %228 = vmatprep.subr.mxu0 0.0
    %229 = vmatpush1.msra.mxu0 %v206
    %230 = vmatprep.subr.mxu0 0.0
    %231 = vmatpush1.msra.mxu0 %v207
    %232 = vmatprep.subr.mxu0 0.0
    %233 = vmatpush1.msra.mxu0 %v208
    %234 = vmatprep.subr.mxu0 0.0
    %235 = vmatpush1.msra.mxu0 %v209
    %236 = vmatprep.subr.mxu0 0.0
    %237 = vmatpush1.msra.mxu0 %v210
    %238 = vmatprep.subr.mxu0 0.0
    %239 = vmatpush1.msra.mxu0 %v211
    %240 = vmatprep.subr.mxu0 0.0
    %241 = vmatpush1.msra.mxu0 %v212
    %242 = vmatprep.subr.mxu0 0.0
    %243 = vmatpush1.msra.mxu0 %v213
    %244 = vmatprep.subr.mxu0 0.0
    %245 = vmatpush1.msra.mxu0 %v214
    %246 = vmatprep.subr.mxu0 0.0
    %247 = vmatpush1.msra.mxu0 %v215
    %248 = vmatprep.subr.mxu0 0.0
    %249 = vmatpush1.msra.mxu0 0.0
    %250 = vmatprep.subr.mxu0 0.0
    %251 = vmatpush1.msra.mxu0 0.0
    %252 = vmatprep.subr.mxu0 0.0
    %253 = vmatpush1.msra.mxu0 0.0
    %254 = vmatprep.subr.mxu0 0.0
    %255 = vmatpush1.msra.mxu0 0.0
    %256 = vmatprep.subr.mxu0 0.0
    %257 = vmatpush1.msra.mxu0 0.0
    %258 = vmatprep.subr.mxu0 0.0
    %259 = vmatpush1.msra.mxu0 0.0
    %260 = vmatprep.subr.mxu0 0.0
    %261 = vmatpush1.msra.mxu0 0.0
    %262 = vmatprep.subr.mxu0 0.0
    %263 = vmatpush1.msra.mxu0 0.0
    %264 = vmatprep.subr.mxu0 0.0
    %265 = vmatpush1.msra.mxu0 0.0
    %266 = vmatprep.subr.mxu0 0.0
    %267 = vmatpush1.msra.mxu0 0.0
    %268 = vmatprep.subr.mxu0 0.0
    %269 = vmatpush1.msra.mxu0 0.0
    %270 = vmatprep.subr.mxu0 0.0
    %271 = vmatpush1.msra.mxu0 0.0
    %272 = vmatprep.subr.mxu0 0.0
    %273 = vmatpush1.msra.mxu0 0.0
    %274 = vmatprep.subr.mxu0 0.0
    %275 = vmatpush1.msra.mxu0 0.0
    %276 = vmatprep.subr.mxu0 0.0
    %277 = vmatpush1.msra.mxu0 0.0
    %278 = vmatprep.subr.mxu0 0.0
    %279 = vmatpush1.msra.mxu0 0.0
    %280 = vmatprep.mubr.f32.mxu0 0.0
    %281 = vmatmul.mubr.f32.gmra.mrb[0].mxu0 %v182
    %v282 = vpop.f32.mrb[0].mxu0
    %v283 = vadd.f32 0.0, %v282
    %v284 = vpop.f32.mrb[0].mxu0
    %285 = vdwg.mxu0
    %v286 = vtanh.pop %v283
    %v287 = vxor.u32 %v283, 2147483648
    %v288 = vmul.f32 %v287, 1.442695
    %v289 = vpow.pop %v288
    %v290 = vadd.f32 %v289, 1.0
    %v291 = vrcp.pop %v290
    %v292 = vmul.f32 1.0, %v291
    %v293 = vsel %vm33, %v286, %v292
    %294 = vrot.lane.b32.xlu0 %v293, 64
    %v295 = vpop.permute.xlu0 %294
    %v296 = vmul.f32 %v293, %v295
    %297 = vrot.lane.b32.xlu0 %v296, 32
    %v298 = vpop.permute.xlu0 %297
    %v299 = vsel %vm35, %v296, %v298
    %v300 = vsel %vm30, %v293, 0.0
    %301 = vrot.lane.b32.xlu0 %v300, 64
    %v302 = vpop.permute.xlu0 %301
    %v303 = vadd.f32 %v300, %v302
    %304 = vrot.lane.b32.xlu0 %v303, 32
    %v305 = vpop.permute.xlu0 %304
    %v306 = vadd.f32 %v303, %v305
    %v307 = vsel %vm34, %v293, 0.0
    %308 = vrot.lane.b32.xlu0 %v307, 64
    %v309 = vpop.permute.xlu0 %308
    %v310 = vadd.f32 %v307, %v309
    %311 = vrot.lane.b32.xlu0 %v310, 32
    %v312 = vpop.permute.xlu0 %311
    %v313 = vadd.f32 %v310, %v312
    %v314 = vsel %vm33, %v181, 0.0
    %315 = vrot.lane.b32.xlu0 %v314, 64
    %v316 = vpop.permute.xlu0 %315
    %v317 = vadd.f32 %v314, %v316
    %318 = vrot.lane.b32.xlu0 %v317, 32
    %v319 = vpop.permute.xlu0 %318
    %v320 = vadd.f32 %v317, %v319
    %v321 = vmul.f32 %v306, %v320
    %v322 = vadd.f32 %v321, %v299
    %v323 = vtanh.pop %v322
    %v324 = vmul.f32 %v313, %v323
    %v325 = vsel %vm27, %v324, %v322
    %s326 = scalar_lea.vmem %s2, 8
    %327 = vst [vmem:[%s326] sm:$0xff] %v325
    %s328 = scalar_lea.vmem %s0, 16
    %v329 = vld [vmem:[%s328] sm:$0xff]
    %v330 = vsel %vm27, %v324, %v329
    %s331 = scalar_lea.vmem [#allocation2], 128
    %v332 = vld [vmem:[%s331] sm:$0xf]
    %v333 = vld [vmem:[%s331 + $0x4] sm:$0xf]
    %v334 = vld [vmem:[%s331 + $0x8] sm:$0xf]
    %v335 = vld [vmem:[%s331 + $0xc] sm:$0xf]
    %v336 = vld [vmem:[%s331 + $0x10] sm:$0xf]
    %v337 = vld [vmem:[%s331 + $0x14] sm:$0xf]
    %v338 = vld [vmem:[%s331 + $0x18] sm:$0xf]
    %v339 = vld [vmem:[%s331 + $0x1c] sm:$0xf]
    %v340 = vld [vmem:[%s331 + $0x20] sm:$0xf]
    %v341 = vld [vmem:[%s331 + $0x24] sm:$0xf]
    %v342 = vld [vmem:[%s331 + $0x28] sm:$0xf]
    %v343 = vld [vmem:[%s331 + $0x2c] sm:$0xf]
    %v344 = vld [vmem:[%s331 + $0x30] sm:$0xf]
    %v345 = vld [vmem:[%s331 + $0x34] sm:$0xf]
    %v346 = vld [vmem:[%s331 + $0x38] sm:$0xf]
    %v347 = vld [vmem:[%s331 + $0x3c] sm:$0xf]
    %v348 = vunpack.c.l.bf16 %v332
    %v349 = vunpack.c.l.bf16 %v333
    %v350 = vunpack.c.l.bf16 %v334
    %v351 = vunpack.c.l.bf16 %v335
    %v352 = vunpack.c.l.bf16 %v336
    %v353 = vunpack.c.l.bf16 %v337
    %v354 = vunpack.c.l.bf16 %v338
    %v355 = vunpack.c.l.bf16 %v339
    %v356 = vunpack.c.l.bf16 %v340
    %v357 = vunpack.c.l.bf16 %v341
    %v358 = vunpack.c.l.bf16 %v342
    %v359 = vunpack.c.l.bf16 %v343
    %v360 = vunpack.c.l.bf16 %v344
    %v361 = vunpack.c.l.bf16 %v345
    %v362 = vunpack.c.l.bf16 %v346
    %v363 = vunpack.c.l.bf16 %v347
    %364 = vmatprep.subr.mxu0 0.0
    %365 = vmatpush1.msra.mxu0 %v348
    %366 = vmatprep.subr.mxu0 0.0
    %367 = vmatpush1.msra.mxu0 %v349
    %368 = vmatprep.subr.mxu0 0.0
    %369 = vmatpush1.msra.mxu0 %v350
    %370 = vmatprep.subr.mxu0 0.0
    %371 = vmatpush1.msra.mxu0 %v351
    %372 = vmatprep.subr.mxu0 0.0
    %373 = vmatpush1.msra.mxu0 %v352
    %374 = vmatprep.subr.mxu0 0.0
    %375 = vmatpush1.msra.mxu0 %v353
    %376 = vmatprep.subr.mxu0 0.0
    %377 = vmatpush1.msra.mxu0 %v354
    %378 = vmatprep.subr.mxu0 0.0
    %379 = vmatpush1.msra.mxu0 %v355
    %380 = vmatprep.subr.mxu0 0.0
    %381 = vmatpush1.msra.mxu0 %v356
    %382 = vmatprep.subr.mxu0 0.0
    %383 = vmatpush1.msra.mxu0 %v357
    %384 = vmatprep.subr.mxu0 0.0
    %385 = vmatpush1.msra.mxu0 %v358
    %386 = vmatprep.subr.mxu0 0.0
    %387 = vmatpush1.msra.mxu0 %v359
    %388 = vmatprep.subr.mxu0 0.0
    %389 = vmatpush1.msra.mxu0 %v360
    %390 = vmatprep.subr.mxu0 0.0
    %391 = vmatpush1.msra.mxu0 %v361
    %392 = vmatprep.subr.mxu0 0.0
    %393 = vmatpush1.msra.mxu0 %v362
    %394 = vmatprep.subr.mxu0 0.0
    %395 = vmatpush1.msra.mxu0 %v363
    %396 = vmatprep.subr.mxu0 0.0
    %397 = vmatpush1.msra.mxu0 0.0
    %398 = vmatprep.subr.mxu0 0.0
    %399 = vmatpush1.msra.mxu0 0.0
    %400 = vmatprep.subr.mxu0 0.0
    %401 = vmatpush1.msra.mxu0 0.0
    %402 = vmatprep.subr.mxu0 0.0
    %403 = vmatpush1.msra.mxu0 0.0
    %404 = vmatprep.subr.mxu0 0.0
    %405 = vmatpush1.msra.mxu0 0.0
    %406 = vmatprep.subr.mxu0 0.0
    %407 = vmatpush1.msra.mxu0 0.0
    %408 = vmatprep.subr.mxu0 0.0
    %409 = vmatpush1.msra.mxu0 0.0
    %410 = vmatprep.subr.mxu0 0.0
    %411 = vmatpush1.msra.mxu0 0.0
    %412 = vmatprep.subr.mxu0 0.0
    %413 = vmatpush1.msra.mxu0 0.0
    %414 = vmatprep.subr.mxu0 0.0
    %415 = vmatpush1.msra.mxu0 0.0
    %416 = vmatprep.subr.mxu0 0.0
    %417 = vmatpush1.msra.mxu0 0.0
    %418 = vmatprep.subr.mxu0 0.0
    %419 = vmatpush1.msra.mxu0 0.0
    %420 = vmatprep.subr.mxu0 0.0
    %421 = vmatpush1.msra.mxu0 0.0
    %422 = vmatprep.subr.mxu0 0.0
    %423 = vmatpush1.msra.mxu0 0.0
    %424 = vmatprep.subr.mxu0 0.0
    %425 = vmatpush1.msra.mxu0 0.0
    %426 = vmatprep.subr.mxu0 0.0
    %427 = vmatpush1.msra.mxu0 0.0
    %428 = vmatprep.mubr.f32.mxu0 0.0
    %429 = vmatmul.mubr.f32.gmra.mrb[0].mxu0 %v330
    %v430 = vpop.f32.mrb[0].mxu0
    %v431 = vadd.f32 0.0, %v430
    %v432 = vpop.f32.mrb[0].mxu0
    %433 = vdwg.mxu0
    %s434 = scalar_lea.vmem %s2, 16
    %435 = vst [vmem:[%s434] sm:$0xff] %v431
    // Predicated region
    $region14: #{decoder_lstm_pallas.1} parent=1 // pred_check
      _
    $region15: #{decoder_lstm_pallas.1} parent=1 // pred_check_branch
      %437 = sbr.rel (0) target = $region17
    $region16: #{decoder_lstm_pallas.1} parent=1 // pred_region
      _
    $region17: #{decoder_lstm_pallas.1} parent=1 // pred_fallthru
      _
    // Predicated region
    $region18: #{decoder_lstm_pallas.1} parent=1 // pred_check
      _
    $region19: #{decoder_lstm_pallas.1} parent=1 // pred_check_branch
      %439 = sbr.rel (0) target = $region21
    $region20: #{decoder_lstm_pallas.1} parent=1 // pred_region
      _
    $region21: #{decoder_lstm_pallas.1} parent=1 // pred_fallthru
      _
    %440 = vsyncpa [#allocation3], 1

</llo_original>
